<compile_context>
chip_gen: v7x
topology: tpu7x:2x2x1
jax: 0.10.0
libtpu: 0.0.40
codegen_flags: <defaults>
</compile_context>

<pallas_src>
import functools

import jax
import jax.numpy as jnp
from jax.experimental import pallas as pl
from jax.experimental.pallas import tpu as pltpu


def _mlp_kernel(x_ref, w1_ref, b1_ref, w2_ref, b2_ref, w3_ref, b3_ref, o_ref):
    # layer1 + ReLU (accumulate in f32, activation in f32, re-pack to bf16)
    h = jnp.dot(x_ref[...], w1_ref[...], preferred_element_type=jnp.float32)
    h = jnp.maximum(h + b1_ref[...], 0.0).astype(w2_ref.dtype)
    # layer2 + ReLU
    h = jnp.dot(h, w2_ref[...], preferred_element_type=jnp.float32)
    h = jnp.maximum(h + b2_ref[...], 0.0).astype(w3_ref.dtype)
    # layer3 (no activation) -- lane-dense (padded-to-128) output store
    out = jnp.dot(h, w3_ref[...], preferred_element_type=jnp.float32)
    o_ref[...] = (out + b3_ref[...]).astype(o_ref.dtype)


@functools.partial(jax.jit, static_argnames=("block_b", "compute_dtype"))
def basic_mlp_forward(x, params, *, block_b=512, compute_dtype=jnp.bfloat16):
    """x: [B, ...] (trailing dims flattened like torch's x.view(B, -1))."""
    b = x.shape[0]
    x2d = x.reshape(b, -1).astype(compute_dtype)
    in_features = x2d.shape[1]

    w1, b1, w2, b2, w3, b3 = params
    hidden = w1.shape[1]
    num_classes = w3.shape[1]

    # --- lane-pad the final layer to a multiple of 128 (zero columns) -------
    n_pad = max(128, pl.cdiv(num_classes, 128) * 128)
    w3p = jnp.zeros((hidden, n_pad), compute_dtype).at[:, :num_classes].set(
        w3.astype(compute_dtype))
    b3p = jnp.zeros((1, n_pad), jnp.float32).at[:, :num_classes].set(
        b3.astype(jnp.float32))

    # --- batch tiling: multiple of 16 rows (bf16 sublane-pack friendly) -----
    tb = min(block_b, max(16, pl.cdiv(b, 16) * 16))
    pb = pl.cdiv(b, tb) * tb
    if pb != b:
        x2d = jnp.pad(x2d, ((0, pb - b), (0, 0)))

    grid = (pb // tb,)
    out = pl.pallas_call(
        _mlp_kernel,
        out_shape=jax.ShapeDtypeStruct((pb, n_pad), jnp.float32),
        grid_spec=pltpu.PrefetchScalarGridSpec(
            num_scalar_prefetch=0,
            grid=grid,
            in_specs=[
                # streamed activation tile
                pl.BlockSpec((tb, in_features), lambda i: (i, 0)),
                # resident weights / biases (same block every step)
                pl.BlockSpec((in_features, hidden), lambda i: (0, 0)),
                pl.BlockSpec((1, hidden), lambda i: (0, 0)),
                pl.BlockSpec((hidden, hidden), lambda i: (0, 0)),
                pl.BlockSpec((1, hidden), lambda i: (0, 0)),
                pl.BlockSpec((hidden, n_pad), lambda i: (0, 0)),
                pl.BlockSpec((1, n_pad), lambda i: (0, 0)),
            ],
            out_specs=pl.BlockSpec((tb, n_pad), lambda i: (i, 0)),
        ),
        compiler_params=pltpu.CompilerParams(
            dimension_semantics=("parallel",),
            vmem_limit_bytes=32 * 1024 * 1024,
        ),
    )(
        x2d,
        w1.astype(compute_dtype), b1.astype(jnp.float32),
        w2.astype(compute_dtype), b2.astype(jnp.float32),
        w3p, b3p,
    )
    # slice padded rows / lanes back to the logical output
    return out[:b, :num_classes]


def init_params(key, input_size, hidden_size, num_classes):
    """Mimics nn.Linear's uniform(-1/sqrt(fan_in), 1/sqrt(fan_in)) init (f32)."""
    ks = jax.random.split(key, 6)

    def linear(kw, kb, fan_in, fan_out):
        bound = 1.0 / jnp.sqrt(jnp.float32(fan_in))
        w = jax.random.uniform(kw, (fan_in, fan_out), jnp.float32, -bound, bound)
        bias = jax.random.uniform(kb, (1, fan_out), jnp.float32, -bound, bound)
        return w, bias

    w1, b1 = linear(ks[0], ks[1], input_size, hidden_size)
    w2, b2 = linear(ks[2], ks[3], hidden_size, hidden_size)
    w3, b3 = linear(ks[4], ks[5], hidden_size, num_classes)
    return (w1, b1, w2, b2, w3, b3)


def _reference(x, params, compute_dtype=jnp.bfloat16):
    """Pure-JAX reference with the same bf16-weights / f32-accum numerics."""
    b = x.shape[0]
    h = x.reshape(b, -1).astype(compute_dtype)
    w1, b1, w2, b2, w3, b3 = params
    h = jnp.maximum(
        jnp.dot(h, w1.astype(compute_dtype), preferred_element_type=jnp.float32) + b1,
        0.0).astype(compute_dtype)
    h = jnp.maximum(
        jnp.dot(h, w2.astype(compute_dtype), preferred_element_type=jnp.float32) + b2,
        0.0).astype(compute_dtype)
    return jnp.dot(h, w3.astype(compute_dtype),
                   preferred_element_type=jnp.float32) + b3


if __name__ == "__main__":
    # Small MNIST-like shapes: batch=8, 1x16x16 -> input_size=256,
    # hidden_size=128, num_classes=10.  Activation = ReLU.
    B, C, H, W = 8, 1, 16, 16
    input_size = C * H * W
    hidden_size = 128
    num_classes = 10

    key = jax.random.PRNGKey(0)
    kx, kp = jax.random.split(key)
    x = jax.random.normal(kx, (B, C, H, W), jnp.float32)
    params = init_params(kp, input_size, hidden_size, num_classes)

    out = basic_mlp_forward(x, params)
    out = jax.block_until_ready(out)

    ref = _reference(x, params)
    assert out.shape == (B, num_classes), out.shape
    assert jnp.allclose(out, ref, atol=1e-2, rtol=1e-2), "mismatch vs. reference"
    print("KERNEL_OK")
</pallas_src>

<mosaic_0001>
module attributes {stable_mosaic.version = 11 : i64} {
  func.func @_mlp_kernel(%arg0: i32, %arg1: memref<16x256xbf16, #tpu.memory_space<vmem>>, %arg2: memref<256x128xbf16, #tpu.memory_space<vmem>>, %arg3: memref<1x128xf32, #tpu.memory_space<vmem>>, %arg4: memref<128x128xbf16, #tpu.memory_space<vmem>>, %arg5: memref<1x128xf32, #tpu.memory_space<vmem>>, %arg6: memref<128x128xbf16, #tpu.memory_space<vmem>>, %arg7: memref<1x128xf32, #tpu.memory_space<vmem>>, %arg8: memref<16x128xf32, #tpu.memory_space<vmem>>) attributes {dimension_semantics = [#tpu.dimension_semantics<parallel>], iteration_bounds = array<i64: 1>, scalar_prefetch = 0 : i64, scratch_operands = 0 : i64, tpu.core_type = #tpu.core_type<tc>, window_params = [{transform_indices = @transform_0, window_bounds = array<i64: 16, 256>}, {pipeline_mode = #tpu.pipeline_mode<synchronous>, transform_indices = @transform_1, window_bounds = array<i64: 256, 128>}, {pipeline_mode = #tpu.pipeline_mode<synchronous>, transform_indices = @transform_2, window_bounds = array<i64: 1, 128>}, {pipeline_mode = #tpu.pipeline_mode<synchronous>, transform_indices = @transform_3, window_bounds = array<i64: 128, 128>}, {pipeline_mode = #tpu.pipeline_mode<synchronous>, transform_indices = @transform_4, window_bounds = array<i64: 1, 128>}, {pipeline_mode = #tpu.pipeline_mode<synchronous>, transform_indices = @transform_5, window_bounds = array<i64: 128, 128>}, {pipeline_mode = #tpu.pipeline_mode<synchronous>, transform_indices = @transform_6, window_bounds = array<i64: 1, 128>}, {transform_indices = @transform_7, window_bounds = array<i64: 16, 128>}]} {
    %c0 = arith.constant 0 : index
    %c0_0 = arith.constant 0 : index
    %0 = vector.load %arg1[%c0, %c0_0] : memref<16x256xbf16, #tpu.memory_space<vmem>>, vector<16x256xbf16>
    %c0_1 = arith.constant 0 : index
    %c0_2 = arith.constant 0 : index
    %1 = vector.load %arg2[%c0_1, %c0_2] : memref<256x128xbf16, #tpu.memory_space<vmem>>, vector<256x128xbf16>
    %cst = arith.constant dense<0.000000e+00> : vector<16x128xf32>
    %2 = tpu.matmul %0, %1, %cst {dimension_numbers = #tpu.dot_dimension_numbers<[1], [0], [0], [1], [0, 0, 1, 1], [], []>} : vector<16x256xbf16>, vector<256x128xbf16>, vector<16x128xf32> -> vector<16x128xf32>
    %c0_3 = arith.constant 0 : index
    %c0_4 = arith.constant 0 : index
    %3 = vector.load %arg3[%c0_3, %c0_4] : memref<1x128xf32, #tpu.memory_space<vmem>>, vector<1x128xf32>
    %4 = vector.broadcast %3 : vector<1x128xf32> to vector<16x128xf32>
    %5 = arith.addf %2, %4 : vector<16x128xf32>
    %cst_5 = arith.constant 0.000000e+00 : f32
    %6 = vector.broadcast %cst_5 : f32 to vector<16x128xf32>
    %7 = arith.maximumf %5, %6 : vector<16x128xf32>
    %8 = arith.truncf %7 : vector<16x128xf32> to vector<16x128xbf16>
    %c0_6 = arith.constant 0 : index
    %c0_7 = arith.constant 0 : index
    %9 = vector.load %arg4[%c0_6, %c0_7] : memref<128x128xbf16, #tpu.memory_space<vmem>>, vector<128x128xbf16>
    %cst_8 = arith.constant dense<0.000000e+00> : vector<16x128xf32>
    %10 = tpu.matmul %8, %9, %cst_8 {dimension_numbers = #tpu.dot_dimension_numbers<[1], [0], [0], [1], [0, 0, 1, 1], [], []>} : vector<16x128xbf16>, vector<128x128xbf16>, vector<16x128xf32> -> vector<16x128xf32>
    %c0_9 = arith.constant 0 : index
    %c0_10 = arith.constant 0 : index
    %11 = vector.load %arg5[%c0_9, %c0_10] : memref<1x128xf32, #tpu.memory_space<vmem>>, vector<1x128xf32>
    %12 = vector.broadcast %11 : vector<1x128xf32> to vector<16x128xf32>
    %13 = arith.addf %10, %12 : vector<16x128xf32>
    %cst_11 = arith.constant 0.000000e+00 : f32
    %14 = vector.broadcast %cst_11 : f32 to vector<16x128xf32>
    %15 = arith.maximumf %13, %14 : vector<16x128xf32>
    %16 = arith.truncf %15 : vector<16x128xf32> to vector<16x128xbf16>
    %c0_12 = arith.constant 0 : index
    %c0_13 = arith.constant 0 : index
    %17 = vector.load %arg6[%c0_12, %c0_13] : memref<128x128xbf16, #tpu.memory_space<vmem>>, vector<128x128xbf16>
    %cst_14 = arith.constant dense<0.000000e+00> : vector<16x128xf32>
    %18 = tpu.matmul %16, %17, %cst_14 {dimension_numbers = #tpu.dot_dimension_numbers<[1], [0], [0], [1], [0, 0, 1, 1], [], []>} : vector<16x128xbf16>, vector<128x128xbf16>, vector<16x128xf32> -> vector<16x128xf32>
    %c0_15 = arith.constant 0 : index
    %c0_16 = arith.constant 0 : index
    %19 = vector.load %arg7[%c0_15, %c0_16] : memref<1x128xf32, #tpu.memory_space<vmem>>, vector<1x128xf32>
    %20 = vector.broadcast %19 : vector<1x128xf32> to vector<16x128xf32>
    %21 = arith.addf %18, %20 : vector<16x128xf32>
    %c0_17 = arith.constant 0 : index
    %c0_18 = arith.constant 0 : index
    %22 = vector.load %arg8[%c0_17, %c0_18] : memref<16x128xf32, #tpu.memory_space<vmem>>, vector<16x128xf32>
    tpu.vector_store %arg8[%c0_17, %c0_18], %21 {strides = array<i32>} : memref<16x128xf32, #tpu.memory_space<vmem>>, vector<16x128xf32>,
    return
  }
  func.func @transform_0(%arg0: i32) -> (i32, i32) {
    %c0_i32 = arith.constant 0 : i32
    %c0_i32_0 = arith.constant 0 : i32
    return %arg0, %c0_i32 : i32, i32
  }
  func.func @transform_1(%arg0: i32) -> (i32, i32) {
    %c0_i32 = arith.constant 0 : i32
    %c0_i32_0 = arith.constant 0 : i32
    %c0_i32_1 = arith.constant 0 : i32
    return %c0_i32, %c0_i32_0 : i32, i32
  }
  func.func @transform_2(%arg0: i32) -> (i32, i32) {
    %c0_i32 = arith.constant 0 : i32
    %c0_i32_0 = arith.constant 0 : i32
    %c0_i32_1 = arith.constant 0 : i32
    return %c0_i32, %c0_i32_0 : i32, i32
  }
  func.func @transform_3(%arg0: i32) -> (i32, i32) {
    %c0_i32 = arith.constant 0 : i32
    %c0_i32_0 = arith.constant 0 : i32
    %c0_i32_1 = arith.constant 0 : i32
    return %c0_i32, %c0_i32_0 : i32, i32
  }
  func.func @transform_4(%arg0: i32) -> (i32, i32) {
    %c0_i32 = arith.constant 0 : i32
    %c0_i32_0 = arith.constant 0 : i32
    %c0_i32_1 = arith.constant 0 : i32
    return %c0_i32, %c0_i32_0 : i32, i32
  }
  func.func @transform_5(%arg0: i32) -> (i32, i32) {
    %c0_i32 = arith.constant 0 : i32
    %c0_i32_0 = arith.constant 0 : i32
    %c0_i32_1 = arith.constant 0 : i32
    return %c0_i32, %c0_i32_0 : i32, i32
  }
  func.func @transform_6(%arg0: i32) -> (i32, i32) {
    %c0_i32 = arith.constant 0 : i32
    %c0_i32_0 = arith.constant 0 : i32
    %c0_i32_1 = arith.constant 0 : i32
    return %c0_i32, %c0_i32_0 : i32, i32
  }
  func.func @transform_7(%arg0: i32) -> (i32, i32) {
    %c0_i32 = arith.constant 0 : i32
    %c0_i32_0 = arith.constant 0 : i32
    return %arg0, %c0_i32 : i32, i32
  }
}

</mosaic_0001>

<llo_original>
// kernel: basic_mlp_forward.1
$region0: #{basic_mlp_forward.1}
  #allocation0 [shape = 'u32[]', space=smem, size = 0x4, offset = 0x4, fixed_abs, tag = 'smem constant byte address 0x4 - core index']
  #allocation1 [shape = 'u32[144,128]{1,0:T(1,128)}', space=vmem, size = 0x12000, scoped, tag = 'internal scratch']
  %s0 = inlined_call_operand.vmem [shape: bf16[16,256], index: 0, kind: input, shape index: {}]
  %s1 = inlined_call_operand.vmem [shape: bf16[256,128], index: 1, kind: input, shape index: {}]
  %s2 = inlined_call_operand.vmem [shape: f32[1,128], index: 2, kind: input, shape index: {}]
  %s3 = inlined_call_operand.vmem [shape: bf16[128,128], index: 3, kind: input, shape index: {}]
  %s4 = inlined_call_operand.vmem [shape: f32[1,128], index: 4, kind: input, shape index: {}]
  %s5 = inlined_call_operand.vmem [shape: bf16[128,128], index: 5, kind: input, shape index: {}]
  %s6 = inlined_call_operand.vmem [shape: f32[1,128], index: 6, kind: input, shape index: {}]
  %s7 = inlined_call_operand.vmem [shape: f32[16,128], index: 7, kind: output, shape index: {}]
  %s8 = sld [smem:[#allocation0]]
  $region38: #{basic_mlp_forward.1} parent=0
    _
  %s10 = ssub.s32 1, %s8
  %s11 = scalar_select 0, %s10, %s8
  // Predicated region
  $region2: #{basic_mlp_forward.1} parent=0 // pred_check
    _
  $region3: #{basic_mlp_forward.1} parent=0 // pred_check_branch
    %13 = sbr.rel (0) target = $region5
  $region4: #{basic_mlp_forward.1} parent=0 // pred_region
    _
  $region5: #{basic_mlp_forward.1} parent=0 // pred_fallthru
    _
  // Predicated region
  $region6: #{basic_mlp_forward.1} parent=0 // pred_check
    _
  $region7: #{basic_mlp_forward.1} parent=0 // pred_check_branch
    %15 = sbr.rel (0) target = $region9
  $region8: #{basic_mlp_forward.1} parent=0 // pred_region
    _
  $region9: #{basic_mlp_forward.1} parent=0 // pred_fallthru
    _
  // Predicated region
  $region10: #{basic_mlp_forward.1} parent=0 // pred_check
    _
  $region11: #{basic_mlp_forward.1} parent=0 // pred_check_branch
    %17 = sbr.rel (0) target = $region13
  $region12: #{basic_mlp_forward.1} parent=0 // pred_region
    _
  $region13: #{basic_mlp_forward.1} parent=0 // pred_fallthru
    _
  // Predicated region
  $region14: #{basic_mlp_forward.1} parent=0 // pred_check
    _
  $region15: #{basic_mlp_forward.1} parent=0 // pred_check_branch
    %19 = sbr.rel (0) target = $region17
  $region16: #{basic_mlp_forward.1} parent=0 // pred_region
    _
  $region17: #{basic_mlp_forward.1} parent=0 // pred_fallthru
    _
  // Predicated region
  $region18: #{basic_mlp_forward.1} parent=0 // pred_check
    _
  $region19: #{basic_mlp_forward.1} parent=0 // pred_check_branch
    %21 = sbr.rel (0) target = $region21
  $region20: #{basic_mlp_forward.1} parent=0 // pred_region
    _
  $region21: #{basic_mlp_forward.1} parent=0 // pred_fallthru
    _
  // Predicated region
  $region22: #{basic_mlp_forward.1} parent=0 // pred_check
    _
  $region23: #{basic_mlp_forward.1} parent=0 // pred_check_branch
    %23 = sbr.rel (0) target = $region25
  $region24: #{basic_mlp_forward.1} parent=0 // pred_region
    _
  $region25: #{basic_mlp_forward.1} parent=0 // pred_fallthru
    _
  // Predicated region
  $region26: #{basic_mlp_forward.1} parent=0 // pred_check
    _
  $region27: #{basic_mlp_forward.1} parent=0 // pred_check_branch
    %25 = sbr.rel (0) target = $region29
  $region28: #{basic_mlp_forward.1} parent=0 // pred_region
    _
  $region29: #{basic_mlp_forward.1} parent=0 // pred_fallthru
    _
  %v27 = vld [vmem:[%s0] sm:$0xff]
  %v28 = vld [vmem:[%s0 + $0x8] sm:$0xff]
  %v29 = vld [vmem:[%s1] sm:$0xf]
  %v30 = vld [vmem:[%s1 + $0x4] sm:$0xf]
  %v31 = vld [vmem:[%s1 + $0x8] sm:$0xf]
  %v32 = vld [vmem:[%s1 + $0xc] sm:$0xf]
  %v33 = vld [vmem:[%s1 + $0x10] sm:$0xf]
  %v34 = vld [vmem:[%s1 + $0x14] sm:$0xf]
  %v35 = vld [vmem:[%s1 + $0x18] sm:$0xf]
  %v36 = vld [vmem:[%s1 + $0x1c] sm:$0xf]
  %v37 = vld [vmem:[%s1 + $0x20] sm:$0xf]
  %v38 = vld [vmem:[%s1 + $0x24] sm:$0xf]
  %v39 = vld [vmem:[%s1 + $0x28] sm:$0xf]
  %v40 = vld [vmem:[%s1 + $0x2c] sm:$0xf]
  %v41 = vld [vmem:[%s1 + $0x30] sm:$0xf]
  %v42 = vld [vmem:[%s1 + $0x34] sm:$0xf]
  %v43 = vld [vmem:[%s1 + $0x38] sm:$0xf]
  %v44 = vld [vmem:[%s1 + $0x3c] sm:$0xf]
  %v45 = vld [vmem:[%s1 + $0x40] sm:$0xf]
  %v46 = vld [vmem:[%s1 + $0x44] sm:$0xf]
  %v47 = vld [vmem:[%s1 + $0x48] sm:$0xf]
  %v48 = vld [vmem:[%s1 + $0x4c] sm:$0xf]
  %v49 = vld [vmem:[%s1 + $0x50] sm:$0xf]
  %v50 = vld [vmem:[%s1 + $0x54] sm:$0xf]
  %v51 = vld [vmem:[%s1 + $0x58] sm:$0xf]
  %v52 = vld [vmem:[%s1 + $0x5c] sm:$0xf]
  %v53 = vld [vmem:[%s1 + $0x60] sm:$0xf]
  %v54 = vld [vmem:[%s1 + $0x64] sm:$0xf]
  %v55 = vld [vmem:[%s1 + $0x68] sm:$0xf]
  %v56 = vld [vmem:[%s1 + $0x6c] sm:$0xf]
  %v57 = vld [vmem:[%s1 + $0x70] sm:$0xf]
  %v58 = vld [vmem:[%s1 + $0x74] sm:$0xf]
  %v59 = vld [vmem:[%s1 + $0x78] sm:$0xf]
  %v60 = vld [vmem:[%s1 + $0x7c] sm:$0xf]
  %v61 = vld [vmem:[%s2] sm:$0x1]
  %v63 = vlaneseq
  %v64 = vshrl.u32 %v63, 7
  %v65 = vsub.s32 0, %v64
  %v66 = vrot.slane %v61, %v65
  %v70 = vunpack.c.l.b16 %v27
  %v71 = vunpack.c.h.b16 %v27
  %v72 = vunpack.c.l.b16 %v28
  %v73 = vunpack.c.h.b16 %v28
  %v74 = vpack.c.b16 %v72, %v70
  %v75 = vpack.c.b16 %v73, %v71
  %v110 = vunpack.c.l.b16 %v29
  %v111 = vunpack.c.l.b16 %v30
  %v112 = vunpack.c.l.b16 %v31
  %v113 = vunpack.c.l.b16 %v32
  %v114 = vunpack.c.l.b16 %v33
  %v115 = vunpack.c.l.b16 %v34
  %v116 = vunpack.c.l.b16 %v35
  %v117 = vunpack.c.l.b16 %v36
  %v118 = vunpack.c.l.b16 %v37
  %v119 = vunpack.c.l.b16 %v38
  %v120 = vunpack.c.l.b16 %v39
  %v121 = vunpack.c.l.b16 %v40
  %v122 = vunpack.c.l.b16 %v41
  %v123 = vunpack.c.l.b16 %v42
  %v124 = vunpack.c.l.b16 %v43
  %v125 = vunpack.c.l.b16 %v44
  %v126 = vunpack.c.l.b16 %v45
  %v127 = vunpack.c.l.b16 %v46
  %v128 = vunpack.c.l.b16 %v47
  %v129 = vunpack.c.l.b16 %v48
  %v130 = vunpack.c.l.b16 %v49
  %v131 = vunpack.c.l.b16 %v50
  %v132 = vunpack.c.l.b16 %v51
  %v133 = vunpack.c.l.b16 %v52
  %v134 = vunpack.c.l.b16 %v53
  %v135 = vunpack.c.l.b16 %v54
  %v136 = vunpack.c.l.b16 %v55
  %v137 = vunpack.c.l.b16 %v56
  %v138 = vunpack.c.l.b16 %v57
  %v139 = vunpack.c.l.b16 %v58
  %v140 = vunpack.c.l.b16 %v59
  %v141 = vunpack.c.l.b16 %v60
  %v142 = vpack.c.b16 %v111, %v110
  %v143 = vpack.c.b16 %v113, %v112
  %v144 = vpack.c.b16 %v115, %v114
  %v145 = vpack.c.b16 %v117, %v116
  %v146 = vpack.c.b16 %v119, %v118
  %v147 = vpack.c.b16 %v121, %v120
  %v148 = vpack.c.b16 %v123, %v122
  %v149 = vpack.c.b16 %v125, %v124
  %v150 = vpack.c.b16 %v127, %v126
  %v151 = vpack.c.b16 %v129, %v128
  %v152 = vpack.c.b16 %v131, %v130
  %v153 = vpack.c.b16 %v133, %v132
  %v154 = vpack.c.b16 %v135, %v134
  %v155 = vpack.c.b16 %v137, %v136
  %v156 = vpack.c.b16 %v139, %v138
  %v157 = vpack.c.b16 %v141, %v140
  %174 = vmatprep.subr.bf16.mxu0 0
  %175 = vmatpush1.bf16.msra.mxu0 %v142
  %176 = vmatprep.subr.bf16.mxu0 0
  %177 = vmatpush1.bf16.msra.mxu0 %v143
  %178 = vmatprep.subr.bf16.mxu0 0
  %179 = vmatpush1.bf16.msra.mxu0 %v144
  %180 = vmatprep.subr.bf16.mxu0 0
  %181 = vmatpush1.bf16.msra.mxu0 %v145
  %182 = vmatprep.subr.bf16.mxu0 0
  %183 = vmatpush1.bf16.msra.mxu0 %v146
  %184 = vmatprep.subr.bf16.mxu0 0
  %185 = vmatpush1.bf16.msra.mxu0 %v147
  %186 = vmatprep.subr.bf16.mxu0 0
  %187 = vmatpush1.bf16.msra.mxu0 %v148
  %188 = vmatprep.subr.bf16.mxu0 0
  %189 = vmatpush1.bf16.msra.mxu0 %v149
  %190 = vmatprep.subr.bf16.mxu0 0
  %191 = vmatpush1.bf16.msra.mxu0 %v150
  %192 = vmatprep.subr.bf16.mxu0 0
  %193 = vmatpush1.bf16.msra.mxu0 %v151
  %194 = vmatprep.subr.bf16.mxu0 0
  %195 = vmatpush1.bf16.msra.mxu0 %v152
  %196 = vmatprep.subr.bf16.mxu0 0
  %197 = vmatpush1.bf16.msra.mxu0 %v153
  %198 = vmatprep.subr.bf16.mxu0 0
  %199 = vmatpush1.bf16.msra.mxu0 %v154
  %200 = vmatprep.subr.bf16.mxu0 0
  %201 = vmatpush1.bf16.msra.mxu0 %v155
  %202 = vmatprep.subr.bf16.mxu0 0
  %203 = vmatpush1.bf16.msra.mxu0 %v156
  %204 = vmatprep.subr.bf16.mxu0 0
  %205 = vmatpush1.bf16.msra.mxu0 %v157
  %206 = vmatprep.mubr.bf16.mxu0 %v75
  %207 = vmatmul.mubr.bf16.gmra.mrb[0].mxu0 %v74
  %v208 = vpop.f32.mrb[0].mxu0
  %v209 = vadd.f32 %v66, %v208
  %v210 = vpop.f32.mrb[0].mxu0
  %v211 = vpop.f32.mrb[0].mxu0
  %v212 = vadd.f32 %v66, %v211
  %v213 = vpop.f32.mrb[0].mxu0
  %214 = vdwg.mxu0
  %v215 = vmax.f32 %v209, 0.0
  %v216 = vmax.f32 %v212, 0.0
  %v217 = vpack.c.bf16 %v216, %v215
  %v218 = vld [vmem:[%s3] sm:$0xf]
  %v219 = vld [vmem:[%s3 + $0x4] sm:$0xf]
  %v220 = vld [vmem:[%s3 + $0x8] sm:$0xf]
  %v221 = vld [vmem:[%s3 + $0xc] sm:$0xf]
  %v222 = vld [vmem:[%s3 + $0x10] sm:$0xf]
  %v223 = vld [vmem:[%s3 + $0x14] sm:$0xf]
  %v224 = vld [vmem:[%s3 + $0x18] sm:$0xf]
  %v225 = vld [vmem:[%s3 + $0x1c] sm:$0xf]
  %v226 = vld [vmem:[%s3 + $0x20] sm:$0xf]
  %v227 = vld [vmem:[%s3 + $0x24] sm:$0xf]
  %v228 = vld [vmem:[%s3 + $0x28] sm:$0xf]
  %v229 = vld [vmem:[%s3 + $0x2c] sm:$0xf]
  %v230 = vld [vmem:[%s3 + $0x30] sm:$0xf]
  %v231 = vld [vmem:[%s3 + $0x34] sm:$0xf]
  %v232 = vld [vmem:[%s3 + $0x38] sm:$0xf]
  %v233 = vld [vmem:[%s3 + $0x3c] sm:$0xf]
  %v234 = vld [vmem:[%s4] sm:$0x1]
  %v236 = vlaneseq
  %v237 = vshrl.u32 %v236, 7
  %v238 = vsub.s32 0, %v237
  %v239 = vrot.slane %v234, %v238
  %v257 = vunpack.c.l.b16 %v218
  %v258 = vunpack.c.l.b16 %v219
  %v259 = vunpack.c.l.b16 %v220
  %v260 = vunpack.c.l.b16 %v221
  %v261 = vunpack.c.l.b16 %v222
  %v262 = vunpack.c.l.b16 %v223
  %v263 = vunpack.c.l.b16 %v224
  %v264 = vunpack.c.l.b16 %v225
  %v265 = vunpack.c.l.b16 %v226
  %v266 = vunpack.c.l.b16 %v227
  %v267 = vunpack.c.l.b16 %v228
  %v268 = vunpack.c.l.b16 %v229
  %v269 = vunpack.c.l.b16 %v230
  %v270 = vunpack.c.l.b16 %v231
  %v271 = vunpack.c.l.b16 %v232
  %v272 = vunpack.c.l.b16 %v233
  %v273 = vpack.c.b16 %v258, %v257
  %v274 = vpack.c.b16 %v260, %v259
  %v275 = vpack.c.b16 %v262, %v261
  %v276 = vpack.c.b16 %v264, %v263
  %v277 = vpack.c.b16 %v266, %v265
  %v278 = vpack.c.b16 %v268, %v267
  %v279 = vpack.c.b16 %v270, %v269
  %v280 = vpack.c.b16 %v272, %v271
  %289 = vmatprep.subr.bf16.mxu0 0
  %290 = vmatpush1.bf16.msra.mxu0 %v273
  %291 = vmatprep.subr.bf16.mxu0 0
  %292 = vmatpush1.bf16.msra.mxu0 %v274
  %293 = vmatprep.subr.bf16.mxu0 0
  %294 = vmatpush1.bf16.msra.mxu0 %v275
  %295 = vmatprep.subr.bf16.mxu0 0
  %296 = vmatpush1.bf16.msra.mxu0 %v276
  %297 = vmatprep.subr.bf16.mxu0 0
  %298 = vmatpush1.bf16.msra.mxu0 %v277
  %299 = vmatprep.subr.bf16.mxu0 0
  %300 = vmatpush1.bf16.msra.mxu0 %v278
  %301 = vmatprep.subr.bf16.mxu0 0
  %302 = vmatpush1.bf16.msra.mxu0 %v279
  %303 = vmatprep.subr.bf16.mxu0 0
  %304 = vmatpush1.bf16.msra.mxu0 %v280
  %305 = vmatprep.subr.bf16.mxu0 0
  %306 = vmatpush1.bf16.msra.mxu0 0
  %307 = vmatprep.subr.bf16.mxu0 0
  %308 = vmatpush1.bf16.msra.mxu0 0
  %309 = vmatprep.subr.bf16.mxu0 0
  %310 = vmatpush1.bf16.msra.mxu0 0
  %311 = vmatprep.subr.bf16.mxu0 0
  %312 = vmatpush1.bf16.msra.mxu0 0
  %313 = vmatprep.subr.bf16.mxu0 0
  %314 = vmatpush1.bf16.msra.mxu0 0
  %315 = vmatprep.subr.bf16.mxu0 0
  %316 = vmatpush1.bf16.msra.mxu0 0
  %317 = vmatprep.subr.bf16.mxu0 0
  %318 = vmatpush1.bf16.msra.mxu0 0
  %319 = vmatprep.subr.bf16.mxu0 0
  %320 = vmatpush1.bf16.msra.mxu0 0
  %321 = vmatprep.mubr.bf16.mxu0 0
  %322 = vmatmul.mubr.bf16.gmra.mrb[0].mxu0 %v217
  %v323 = vpop.f32.mrb[0].mxu0
  %v324 = vadd.f32 %v239, %v323
  %v325 = vpop.f32.mrb[0].mxu0
  %v326 = vpop.f32.mrb[0].mxu0
  %v327 = vadd.f32 %v239, %v326
  %v328 = vpop.f32.mrb[0].mxu0
  %329 = vdwg.mxu0
  %v330 = vmax.f32 %v324, 0.0
  %v331 = vmax.f32 %v327, 0.0
  %v332 = vpack.c.bf16 %v331, %v330
  %v333 = vld [vmem:[%s5] sm:$0xf]
  %v334 = vld [vmem:[%s5 + $0x4] sm:$0xf]
  %v335 = vld [vmem:[%s5 + $0x8] sm:$0xf]
  %v336 = vld [vmem:[%s5 + $0xc] sm:$0xf]
  %v337 = vld [vmem:[%s5 + $0x10] sm:$0xf]
  %v338 = vld [vmem:[%s5 + $0x14] sm:$0xf]
  %v339 = vld [vmem:[%s5 + $0x18] sm:$0xf]
  %v340 = vld [vmem:[%s5 + $0x1c] sm:$0xf]
  %v341 = vld [vmem:[%s5 + $0x20] sm:$0xf]
  %v342 = vld [vmem:[%s5 + $0x24] sm:$0xf]
  %v343 = vld [vmem:[%s5 + $0x28] sm:$0xf]
  %v344 = vld [vmem:[%s5 + $0x2c] sm:$0xf]
  %v345 = vld [vmem:[%s5 + $0x30] sm:$0xf]
  %v346 = vld [vmem:[%s5 + $0x34] sm:$0xf]
  %v347 = vld [vmem:[%s5 + $0x38] sm:$0xf]
  %v348 = vld [vmem:[%s5 + $0x3c] sm:$0xf]
  %v349 = vld [vmem:[%s6] sm:$0x1]
  %v351 = vlaneseq
  %v352 = vshrl.u32 %v351, 7
  %v353 = vsub.s32 0, %v352
  %v354 = vrot.slane %v349, %v353
  %v372 = vunpack.c.l.b16 %v333
  %v373 = vunpack.c.l.b16 %v334
  %v374 = vunpack.c.l.b16 %v335
  %v375 = vunpack.c.l.b16 %v336
  %v376 = vunpack.c.l.b16 %v337
  %v377 = vunpack.c.l.b16 %v338
  %v378 = vunpack.c.l.b16 %v339
  %v379 = vunpack.c.l.b16 %v340
  %v380 = vunpack.c.l.b16 %v341
  %v381 = vunpack.c.l.b16 %v342
  %v382 = vunpack.c.l.b16 %v343
  %v383 = vunpack.c.l.b16 %v344
  %v384 = vunpack.c.l.b16 %v345
  %v385 = vunpack.c.l.b16 %v346
  %v386 = vunpack.c.l.b16 %v347
  %v387 = vunpack.c.l.b16 %v348
  %v388 = vpack.c.b16 %v373, %v372
  %v389 = vpack.c.b16 %v375, %v374
  %v390 = vpack.c.b16 %v377, %v376
  %v391 = vpack.c.b16 %v379, %v378
  %v392 = vpack.c.b16 %v381, %v380
  %v393 = vpack.c.b16 %v383, %v382
  %v394 = vpack.c.b16 %v385, %v384
  %v395 = vpack.c.b16 %v387, %v386
  %404 = vmatprep.subr.bf16.mxu0 0
  %405 = vmatpush1.bf16.msra.mxu0 %v388
  %406 = vmatprep.subr.bf16.mxu0 0
  %407 = vmatpush1.bf16.msra.mxu0 %v389
  %408 = vmatprep.subr.bf16.mxu0 0
  %409 = vmatpush1.bf16.msra.mxu0 %v390
  %410 = vmatprep.subr.bf16.mxu0 0
  %411 = vmatpush1.bf16.msra.mxu0 %v391
  %412 = vmatprep.subr.bf16.mxu0 0
  %413 = vmatpush1.bf16.msra.mxu0 %v392
  %414 = vmatprep.subr.bf16.mxu0 0
  %415 = vmatpush1.bf16.msra.mxu0 %v393
  %416 = vmatprep.subr.bf16.mxu0 0
  %417 = vmatpush1.bf16.msra.mxu0 %v394
  %418 = vmatprep.subr.bf16.mxu0 0
  %419 = vmatpush1.bf16.msra.mxu0 %v395
  %420 = vmatprep.subr.bf16.mxu0 0
  %421 = vmatpush1.bf16.msra.mxu0 0
  %422 = vmatprep.subr.bf16.mxu0 0
  %423 = vmatpush1.bf16.msra.mxu0 0
  %424 = vmatprep.subr.bf16.mxu0 0
  %425 = vmatpush1.bf16.msra.mxu0 0
  %426 = vmatprep.subr.bf16.mxu0 0
  %427 = vmatpush1.bf16.msra.mxu0 0
  %428 = vmatprep.subr.bf16.mxu0 0
  %429 = vmatpush1.bf16.msra.mxu0 0
  %430 = vmatprep.subr.bf16.mxu0 0
  %431 = vmatpush1.bf16.msra.mxu0 0
  %432 = vmatprep.subr.bf16.mxu0 0
  %433 = vmatpush1.bf16.msra.mxu0 0
  %434 = vmatprep.subr.bf16.mxu0 0
  %435 = vmatpush1.bf16.msra.mxu0 0
  %436 = vmatprep.mubr.bf16.mxu0 0
  %437 = vmatmul.mubr.bf16.gmra.mrb[0].mxu0 %v332
  %v438 = vpop.f32.mrb[0].mxu0
  %v439 = vadd.f32 %v354, %v438
  %v440 = vpop.f32.mrb[0].mxu0
  %v441 = vpop.f32.mrb[0].mxu0
  %v442 = vadd.f32 %v354, %v441
  %v443 = vpop.f32.mrb[0].mxu0
  %444 = vdwg.mxu0
  %445 = vst [vmem:[%s7] sm:$0xff] %v439
  %446 = vst [vmem:[%s7 + $0x8] sm:$0xff] %v442
  // Predicated region
  $region30: #{basic_mlp_forward.1} parent=0 // pred_check
    _
  $region31: #{basic_mlp_forward.1} parent=0 // pred_check_branch
    %448 = sbr.rel (0) target = $region33
  $region32: #{basic_mlp_forward.1} parent=0 // pred_region
    _
  $region33: #{basic_mlp_forward.1} parent=0 // pred_fallthru
    _
  // Predicated region
  $region34: #{basic_mlp_forward.1} parent=0 // pred_check
    _
  $region35: #{basic_mlp_forward.1} parent=0 // pred_check_branch
    %450 = sbr.rel (0) target = $region37
  $region36: #{basic_mlp_forward.1} parent=0 // pred_region
    _
  $region37: #{basic_mlp_forward.1} parent=0 // pred_fallthru
    _

</llo_original>
